<compile_context>
chip_gen: v6e
topology: v6e:2x2x1
jax: 0.10.0
libtpu: 0.0.40
codegen_flags: <defaults>
</compile_context>

<pallas_src>
import functools

import jax
import jax.numpy as jnp
from jax import lax
from jax.experimental import pallas as pl
from jax.experimental.pallas import tpu as pltpu

EPS = 1e-5  # PyTorch BatchNorm default eps


# ---------------------------------------------------------------------------
# Pallas kernel: one (channels, tm-spatial) slab; all channels on sublanes,
# spatial positions on lanes (lane-dense loads/stores).
# ---------------------------------------------------------------------------
def attention_block_kernel(
    g_ref,       # (f_g, tm)     gating-signal tile, channels-first
    x_ref,       # (f_l, tm)     feature tile, channels-first
    wg_ref,      # (f_int, f_g)  BN-folded conv weight, W_g branch
    wx_ref,      # (f_int, f_l)  BN-folded conv weight, W_x branch
    consts_ref,  # (f_int, 3)    col 0: combined bias c, col 1: folded wpsi,
                 #               [0, 2]: folded psi bias (scalar)
    out_ref,     # (f_l, tm)
    *,
    psi_on_mxu,  # static bool: use an MXU dot for the f_int -> 1 projection
):
    g = g_ref[...].astype(jnp.float32)
    x = x_ref[...].astype(jnp.float32)

    c_col = consts_ref[:, 0:1]      # (f_int, 1) combined bias (both branches)
    w_psi = consts_ref[:, 1:2]      # (f_int, 1) folded psi conv weight
    c_psi = consts_ref[0:1, 2:3]    # (1, 1)     folded psi bias

    # relu( Wg'@g + Wx'@x + c )  -> (f_int, tm), lane-dense
    a = jnp.dot(wg_ref[...], g, preferred_element_type=jnp.float32)
    a = a + jnp.dot(wx_ref[...], x, preferred_element_type=jnp.float32)
    a = jnp.maximum(a + c_col, 0.0)

    # psi: f_int -> 1 conv, then sigmoid -> (1, tm)
    if psi_on_mxu:
        # Contract the f_int sublane axis on the MXU (no (f_int, tm) temporary,
        # no XLU sublane reduce).
        psi = lax.dot_general(
            w_psi, a, (((0,), (0,)), ((), ())),
            preferred_element_type=jnp.float32) + c_psi
    else:
        # Tiny f_int: a VPU multiply + short sublane reduce is fine.
        psi = jnp.sum(a * w_psi, axis=0, keepdims=True) + c_psi
    psi = jax.nn.sigmoid(psi)

    # gate x (psi broadcasts across the f_l sublanes)
    out_ref[...] = (x * psi).astype(out_ref.dtype)


# ---------------------------------------------------------------------------
# Generation-aware VMEM policy + bytes-based tile sizing
# ---------------------------------------------------------------------------
def _vmem_policy():
    """Return (pipeline buffer budget bytes, vmem_limit_bytes) per generation."""
    kind = ""
    try:
        kind = jax.devices()[0].device_kind.lower()
    except Exception:
        pass
    mib = 1024 * 1024
    if "v7" in kind:
        # 64 MiB physical VMEM, 2 TensorCores running concurrent grid slices:
        # keep pipelined buffers small per core, raise the scoped limit modestly.
        return 16 * mib, 48 * mib
    if "v5 lite" in kind or "v5e" in kind or "v5litepod" in kind:
        # 128 MiB physical but 16 MiB default scoped limit and ~0.8 TB/s HBM.
        return 24 * mib, 64 * mib
    # v6e (and default): 128 MiB physical, 32 MiB default scoped limit.
    return 24 * mib, 64 * mib


def _pick_tile(hw128, per_lane_bytes, budget_bytes, n_batch):
    """Lane-aligned spatial tile sized from a VMEM byte budget.

    Keeps per-step DMA large (>= 512 lanes when the slab allows it, amortizing
    the ~0.35us grid-step overhead) while aiming for >= ~8 total grid steps so
    the BlockSpec pipeline has prefetch/writeback to overlap (>= ~4 per TC on
    v7x)."""
    max_tm = max(128, (budget_bytes // max(per_lane_bytes, 1)) // 128 * 128)
    tm = min(hw128, max_tm)
    min_tm = min(hw128, 512)
    total_steps = n_batch * (-(-hw128 // tm))
    while tm > min_tm and total_steps < 8:
        tm = max(min_tm, ((tm // 2) // 128) * 128)
        total_steps = n_batch * (-(-hw128 // tm))
    return max(128, (tm // 128) * 128)


# ---------------------------------------------------------------------------
# Wrapper: layout glue (reshape + lane padding), BN/bias folding, pallas_call
# ---------------------------------------------------------------------------
def attention_block(g, x, params, *, tm=None, io_dtype=None):
    N, f_g, H, W = g.shape
    _, f_l, _, _ = x.shape
    f_int = params["wg"].shape[1]
    HW = H * W

    # Optional reduced-precision I/O (compute stays f32 inside the kernel).
    in_dtype = jnp.dtype(io_dtype) if io_dtype is not None else jnp.dtype(x.dtype)
    itemsize = in_dtype.itemsize

    # Bytes-based tile budget: double-buffered g, x, out tiles per spatial
    # position, minus the resident (double-buffered) weight/const blocks.
    buf_budget, vmem_limit = _vmem_policy()
    weight_bytes = 2 * 4 * (f_int * f_g + f_int * f_l + f_int * 3)
    per_lane_bytes = 2 * (f_g + 2 * f_l) * itemsize
    budget = max(buf_budget - weight_bytes, 2 * 1024 * 1024)

    hw128 = -(-HW // 128) * 128                    # pad spatial axis to lanes
    if tm is None:
        tm = _pick_tile(hw128, per_lane_bytes, budget, N)
    assert tm % 128 == 0, "tile must be lane-aligned (multiple of 128)"
    hw_pad = -(-hw128 // tm) * tm                  # pad so the tile divides

    # NCHW -> (N, C, H*W): pure reshape; zero-pad the spatial axis if needed so
    # every store is an unmasked, lane-dense vst.  Padded x is zero => padded
    # output is zero and is sliced away below.
    g3 = g.reshape(N, f_g, HW).astype(in_dtype)
    x3 = x.reshape(N, f_l, HW).astype(in_dtype)
    if hw_pad != HW:
        pad = hw_pad - HW
        g3 = jnp.pad(g3, ((0, 0), (0, 0), (0, pad)))
        x3 = jnp.pad(x3, ((0, 0), (0, 0), (0, pad)))

    # Fold eval-mode BatchNorm into per-channel scale/shift (exact for inference).
    def bn_fold(gamma, beta, mean, var):
        scale = gamma / jnp.sqrt(var + EPS)
        shift = beta - scale * mean
        return scale, shift

    sg, tg = bn_fold(params["bn_g_gamma"], params["bn_g_beta"],
                     params["bn_g_mean"], params["bn_g_var"])
    sx, tx = bn_fold(params["bn_x_gamma"], params["bn_x_beta"],
                     params["bn_x_mean"], params["bn_x_var"])
    sp, tp = bn_fold(params["bn_psi_gamma"], params["bn_psi_beta"],
                     params["bn_psi_mean"], params["bn_psi_var"])

    # Fold BN scale into the (channels-first) conv weights; merge conv bias +
    # BN shift of both branches into one per-channel constant.
    wg = (params["wg"].T * sg[:, None]).astype(jnp.float32)   # (f_int, f_g)
    wx = (params["wx"].T * sx[:, None]).astype(jnp.float32)   # (f_int, f_l)
    c = (params["bg"] * sg + tg) + (params["bx"] * sx + tx)   # (f_int,)
    w_psi = params["wpsi"][:, 0] * sp[0]                      # (f_int,)
    c_psi = params["bpsi"][0] * sp[0] + tp[0]                 # scalar

    consts = jnp.zeros((f_int, 3), jnp.float32)
    consts = consts.at[:, 0].set(c.astype(jnp.float32))
    consts = consts.at[:, 1].set(w_psi.astype(jnp.float32))
    consts = consts.at[0, 2].set(c_psi.astype(jnp.float32))

    grid = (N, hw_pad // tm)
    kernel = functools.partial(attention_block_kernel, psi_on_mxu=(f_int >= 32))

    out3 = pl.pallas_call(
        kernel,
        out_shape=jax.ShapeDtypeStruct((N, f_l, hw_pad), in_dtype),
        grid_spec=pltpu.PrefetchScalarGridSpec(
            num_scalar_prefetch=0,
            grid=grid,
            in_specs=[
                pl.BlockSpec((None, f_g, tm), lambda n, i: (n, 0, i)),
                pl.BlockSpec((None, f_l, tm), lambda n, i: (n, 0, i)),
                pl.BlockSpec((f_int, f_g), lambda n, i: (0, 0)),
                pl.BlockSpec((f_int, f_l), lambda n, i: (0, 0)),
                pl.BlockSpec((f_int, 3), lambda n, i: (0, 0)),
            ],
            out_specs=pl.BlockSpec((None, f_l, tm), lambda n, i: (n, 0, i)),
        ),
        compiler_params=pltpu.CompilerParams(
            dimension_semantics=("parallel", "parallel"),
            vmem_limit_bytes=vmem_limit,
        ),
    )(g3, x3, wg, wx, consts)

    if hw_pad != HW:
        out3 = out3[:, :, :HW]
    return out3.reshape(N, f_l, H, W)


# ---------------------------------------------------------------------------
# Pure-JAX reference (same math, NCHW) for validation
# ---------------------------------------------------------------------------
def attention_block_ref(g, x, p):
    def conv1x1(inp, w, b):  # inp NCHW, w (Cin, Cout), b (Cout,)
        return jnp.einsum("nchw,cd->ndhw", inp, w) + b[None, :, None, None]

    def bn(y, gamma, beta, mean, var):
        return (gamma[None, :, None, None] * (y - mean[None, :, None, None])
                / jnp.sqrt(var[None, :, None, None] + EPS)
                + beta[None, :, None, None])

    g1 = bn(conv1x1(g, p["wg"], p["bg"]),
            p["bn_g_gamma"], p["bn_g_beta"], p["bn_g_mean"], p["bn_g_var"])
    x1 = bn(conv1x1(x, p["wx"], p["bx"]),
            p["bn_x_gamma"], p["bn_x_beta"], p["bn_x_mean"], p["bn_x_var"])
    a = jax.nn.relu(g1 + x1)
    psi = bn(conv1x1(a, p["wpsi"], p["bpsi"]),
             p["bn_psi_gamma"], p["bn_psi_beta"], p["bn_psi_mean"], p["bn_psi_var"])
    psi = jax.nn.sigmoid(psi)
    return x * psi


# ---------------------------------------------------------------------------
if __name__ == "__main__":
    # Small shapes consistent with the module: spatial_dims=2, f_g=f_l=8, f_int=4
    N, f_g, f_l, f_int, H, W = 2, 8, 8, 4, 16, 16

    key = jax.random.PRNGKey(0)
    ks = jax.random.split(key, 20)

    params = {
        # conv weights stored as (Cin, Cout) matrices (PyTorch conv weight is
        # (Cout, Cin, 1, 1); equivalent for a 1x1 conv).
        "wg":   jax.random.normal(ks[0], (f_g, f_int), jnp.float32) * 0.1,
        "bg":   jax.random.normal(ks[1], (f_int,), jnp.float32) * 0.1,
        "wx":   jax.random.normal(ks[2], (f_l, f_int), jnp.float32) * 0.1,
        "bx":   jax.random.normal(ks[3], (f_int,), jnp.float32) * 0.1,
        "wpsi": jax.random.normal(ks[4], (f_int, 1), jnp.float32) * 0.1,
        "bpsi": jax.random.normal(ks[5], (1,), jnp.float32) * 0.1,
        # eval-mode BatchNorm parameters (gamma, beta, running_mean, running_var)
        "bn_g_gamma": jax.random.uniform(ks[6], (f_int,), jnp.float32, 0.5, 1.5),
        "bn_g_beta":  jax.random.normal(ks[7], (f_int,), jnp.float32) * 0.1,
        "bn_g_mean":  jax.random.normal(ks[8], (f_int,), jnp.float32) * 0.1,
        "bn_g_var":   jax.random.uniform(ks[9], (f_int,), jnp.float32, 0.5, 1.5),
        "bn_x_gamma": jax.random.uniform(ks[10], (f_int,), jnp.float32, 0.5, 1.5),
        "bn_x_beta":  jax.random.normal(ks[11], (f_int,), jnp.float32) * 0.1,
        "bn_x_mean":  jax.random.normal(ks[12], (f_int,), jnp.float32) * 0.1,
        "bn_x_var":   jax.random.uniform(ks[13], (f_int,), jnp.float32, 0.5, 1.5),
        "bn_psi_gamma": jax.random.uniform(ks[14], (1,), jnp.float32, 0.5, 1.5),
        "bn_psi_beta":  jax.random.normal(ks[15], (1,), jnp.float32) * 0.1,
        "bn_psi_mean":  jax.random.normal(ks[16], (1,), jnp.float32) * 0.1,
        "bn_psi_var":   jax.random.uniform(ks[17], (1,), jnp.float32, 0.5, 1.5),
    }

    g = jax.random.normal(ks[18], (N, f_g, H, W), jnp.float32)
    x = jax.random.normal(ks[19], (N, f_l, H, W), jnp.float32)

    out = attention_block(g, x, params)
    out = jax.block_until_ready(out)

    ref = attention_block_ref(g, x, params)
    assert out.shape == ref.shape == (N, f_l, H, W)
    # Default MXU precision vs the XLA-lowered reference; K is tiny so 1e-4 is
    # comfortably tight.  Use precision=HIGHEST only if accuracy demands it.
    assert jnp.allclose(out, ref, atol=1e-4, rtol=1e-4), "mismatch vs JAX reference"

    print("KERNEL_OK")
</pallas_src>

<mosaic_0001>
module attributes {stable_mosaic.version = 11 : i64} {
  func.func @attention_block_kernel(%arg0: i32, %arg1: i32, %arg2: memref<1x8x256xf32, #tpu.memory_space<vmem>>, %arg3: memref<1x8x256xf32, #tpu.memory_space<vmem>>, %arg4: memref<4x8xf32, #tpu.memory_space<vmem>>, %arg5: memref<4x8xf32, #tpu.memory_space<vmem>>, %arg6: memref<4x3xf32, #tpu.memory_space<vmem>>, %arg7: memref<1x8x256xf32, #tpu.memory_space<vmem>>) attributes {dimension_semantics = [#tpu.dimension_semantics<parallel>, #tpu.dimension_semantics<parallel>], iteration_bounds = array<i64: 2, 1>, scalar_prefetch = 0 : i64, scratch_operands = 0 : i64, tpu.core_type = #tpu.core_type<tc>, window_params = [{transform_indices = @transform_0, window_bounds = array<i64: 1, 8, 256>}, {transform_indices = @transform_1, window_bounds = array<i64: 1, 8, 256>}, {pipeline_mode = #tpu.pipeline_mode<synchronous>, transform_indices = @transform_2, window_bounds = array<i64: 4, 8>}, {pipeline_mode = #tpu.pipeline_mode<synchronous>, transform_indices = @transform_3, window_bounds = array<i64: 4, 8>}, {pipeline_mode = #tpu.pipeline_mode<synchronous>, transform_indices = @transform_4, window_bounds = array<i64: 4, 3>}, {transform_indices = @transform_5, window_bounds = array<i64: 1, 8, 256>}]} {
    %c0 = arith.constant 0 : index
    %c0_0 = arith.constant 0 : index
    %c0_1 = arith.constant 0 : index
    %0 = vector.load %arg2[%c0, %c0_0, %c0_1] : memref<1x8x256xf32, #tpu.memory_space<vmem>>, vector<1x8x256xf32>
    %1 = vector.shape_cast %0 : vector<1x8x256xf32> to vector<8x256xf32>
    %c0_2 = arith.constant 0 : index
    %c0_3 = arith.constant 0 : index
    %c0_4 = arith.constant 0 : index
    %2 = vector.load %arg3[%c0_2, %c0_3, %c0_4] : memref<1x8x256xf32, #tpu.memory_space<vmem>>, vector<1x8x256xf32>
    %3 = vector.shape_cast %2 : vector<1x8x256xf32> to vector<8x256xf32>
    %c0_5 = arith.constant 0 : index
    %c0_6 = arith.constant 0 : index
    %4 = vector.load %arg6[%c0_5, %c0_6] : memref<4x3xf32, #tpu.memory_space<vmem>>, vector<4x1xf32>
    %c0_7 = arith.constant 0 : index
    %c1 = arith.constant 1 : index
    %5 = vector.load %arg6[%c0_7, %c1] : memref<4x3xf32, #tpu.memory_space<vmem>>, vector<4x1xf32>
    %c0_8 = arith.constant 0 : index
    %c2 = arith.constant 2 : index
    %6 = vector.load %arg6[%c0_8, %c2] : memref<4x3xf32, #tpu.memory_space<vmem>>, vector<1x1xf32>
    %c0_9 = arith.constant 0 : index
    %c0_10 = arith.constant 0 : index
    %7 = vector.load %arg4[%c0_9, %c0_10] : memref<4x8xf32, #tpu.memory_space<vmem>>, vector<4x8xf32>
    %cst = arith.constant dense<0.000000e+00> : vector<4x256xf32>
    %8 = tpu.matmul %7, %1, %cst {dimension_numbers = #tpu.dot_dimension_numbers<[1], [0], [0], [1], [0, 0, 1, 1], [], []>} : vector<4x8xf32>, vector<8x256xf32>, vector<4x256xf32> -> vector<4x256xf32>
    %c0_11 = arith.constant 0 : index
    %c0_12 = arith.constant 0 : index
    %9 = vector.load %arg5[%c0_11, %c0_12] : memref<4x8xf32, #tpu.memory_space<vmem>>, vector<4x8xf32>
    %cst_13 = arith.constant dense<0.000000e+00> : vector<4x256xf32>
    %10 = tpu.matmul %9, %3, %cst_13 {dimension_numbers = #tpu.dot_dimension_numbers<[1], [0], [0], [1], [0, 0, 1, 1], [], []>} : vector<4x8xf32>, vector<8x256xf32>, vector<4x256xf32> -> vector<4x256xf32>
    %11 = arith.addf %8, %10 : vector<4x256xf32>
    %12 = vector.broadcast %4 : vector<4x1xf32> to vector<4x256xf32>
    %13 = arith.addf %11, %12 : vector<4x256xf32>
    %cst_14 = arith.constant 0.000000e+00 : f32
    %14 = vector.broadcast %cst_14 : f32 to vector<4x256xf32>
    %15 = arith.maximumf %13, %14 : vector<4x256xf32>
    %16 = vector.broadcast %5 : vector<4x1xf32> to vector<4x256xf32>
    %17 = arith.mulf %15, %16 : vector<4x256xf32>
    %cst_15 = arith.constant dense<0.000000e+00> : vector<256xf32>
    %18 = vector.multi_reduction <add>, %17, %cst_15 [0] : vector<4x256xf32> to vector<256xf32>
    %19 = vector.shape_cast %18 : vector<256xf32> to vector<1x256xf32>
    %20 = vector.broadcast %6 : vector<1x1xf32> to vector<1x256xf32>
    %21 = arith.addf %19, %20 : vector<1x256xf32>
    %22 = arith.negf %21 : vector<1x256xf32>
    %23 = math.exp %22 : vector<1x256xf32>
    %cst_16 = arith.constant 1.000000e+00 : f32
    %24 = vector.broadcast %cst_16 : f32 to vector<1x256xf32>
    %25 = arith.addf %24, %23 : vector<1x256xf32>
    %26 = arith.divf %24, %25 : vector<1x256xf32>
    %27 = vector.broadcast %26 : vector<1x256xf32> to vector<8x256xf32>
    %28 = arith.mulf %3, %27 : vector<8x256xf32>
    %c0_17 = arith.constant 0 : index
    %c0_18 = arith.constant 0 : index
    %c0_19 = arith.constant 0 : index
    %29 = vector.load %arg7[%c0_17, %c0_18, %c0_19] : memref<1x8x256xf32, #tpu.memory_space<vmem>>, vector<1x8x256xf32>
    %30 = vector.shape_cast %29 : vector<1x8x256xf32> to vector<8x256xf32>
    %31 = vector.shape_cast %28 : vector<8x256xf32> to vector<1x8x256xf32>
    tpu.vector_store %arg7[%c0_17, %c0_18, %c0_19], %31 {strides = array<i32>} : memref<1x8x256xf32, #tpu.memory_space<vmem>>, vector<1x8x256xf32>,
    return
  }
  func.func @transform_0(%arg0: i32, %arg1: i32) -> (i32, i32, i32) {
    %c0_i32 = arith.constant 0 : i32
    %c0_i32_0 = arith.constant 0 : i32
    return %arg0, %c0_i32, %arg1 : i32, i32, i32
  }
  func.func @transform_1(%arg0: i32, %arg1: i32) -> (i32, i32, i32) {
    %c0_i32 = arith.constant 0 : i32
    %c0_i32_0 = arith.constant 0 : i32
    return %arg0, %c0_i32, %arg1 : i32, i32, i32
  }
  func.func @transform_2(%arg0: i32, %arg1: i32) -> (i32, i32) {
    %c0_i32 = arith.constant 0 : i32
    %c0_i32_0 = arith.constant 0 : i32
    %c0_i32_1 = arith.constant 0 : i32
    return %c0_i32, %c0_i32_0 : i32, i32
  }
  func.func @transform_3(%arg0: i32, %arg1: i32) -> (i32, i32) {
    %c0_i32 = arith.constant 0 : i32
    %c0_i32_0 = arith.constant 0 : i32
    %c0_i32_1 = arith.constant 0 : i32
    return %c0_i32, %c0_i32_0 : i32, i32
  }
  func.func @transform_4(%arg0: i32, %arg1: i32) -> (i32, i32) {
    %c0_i32 = arith.constant 0 : i32
    %c0_i32_0 = arith.constant 0 : i32
    %c0_i32_1 = arith.constant 0 : i32
    return %c0_i32, %c0_i32_0 : i32, i32
  }
  func.func @transform_5(%arg0: i32, %arg1: i32) -> (i32, i32, i32) {
    %c0_i32 = arith.constant 0 : i32
    %c0_i32_0 = arith.constant 0 : i32
    return %arg0, %c0_i32, %arg1 : i32, i32, i32
  }
}

</mosaic_0001>

<llo_original>
// kernel: tpu_custom_call.1
$region0: #{tpu_custom_call.1}
  #allocation0 [shape = 'u32[]', space=smem, size = 0x4, offset = 0x4, fixed_abs, tag = 'smem constant byte address 0x4 - core index']
  #allocation1 [shape = 'u32[144,128]{1,0:T(1,128)}', space=vmem, size = 0x12000, scoped, tag = 'internal scratch']
  %s0 = inlined_call_operand.hbm [shape: f32[2,8,256], index: 0, kind: input, shape index: {}]
  %s1 = inlined_call_operand.hbm [shape: f32[2,8,256], index: 1, kind: input, shape index: {}]
  %s2 = inlined_call_operand.hbm [shape: f32[4,8], index: 2, kind: input, shape index: {}]
  %s3 = inlined_call_operand.vmem [shape: f32[4,8], index: 3, kind: input, shape index: {}]
  %s4 = inlined_call_operand.hbm [shape: f32[4,3], index: 4, kind: input, shape index: {}]
  %s5 = inlined_call_operand.hbm [shape: f32[2,8,256], index: 5, kind: output, shape index: {}]
  %s6 = sld [smem:[#allocation0]]
  $region69: #{tpu_custom_call.1} parent=0
    _
  %s8 = ssub.s32 1, %s6
  %s9 = scalar_select 0, %s8, %s6
  $region1: #{tpu_custom_call.1} parent=0
    #allocation2 [shape = 'u8[16384]{0}', space=vmem, size = 0x4000, scoped, tag = 'input window, operand 0']
    #allocation3 [shape = 's32[2]{0}', space=sflag, size = 0x8, scoped, tag = 'scoped memory for tpu_custom_call.1']
    #allocation4 [shape = 's32[2]{0}', space=sflag, size = 0x8, scoped, tag = 'scoped memory for tpu_custom_call.1']
    #allocation5 [shape = 'u8[16384]{0}', space=vmem, size = 0x4000, scoped, tag = 'input window, operand 1']
    #allocation6 [shape = 's32[2]{0}', space=sflag, size = 0x8, scoped, tag = 'scoped memory for tpu_custom_call.1']
    #allocation7 [shape = 'u8[2048]{0}', space=vmem, size = 0x800, scoped, tag = 'input window, operand 2, single buffered']
    #allocation8 [shape = 'u8[2048]{0}', space=vmem, size = 0x800, scoped, tag = 'input window, operand 4, single buffered']
    #allocation9 [shape = 's32[1]{0}', space=sflag, size = 0x4, scoped, tag = 'scoped memory for tpu_custom_call.1']
    #allocation10 [shape = 'u8[16384]{0}', space=vmem, size = 0x4000, scoped, tag = 'output window, operand 0']
    %10 = vsyncpa [#allocation3], 0
    %s11 = scalar_lea.sflag [#allocation3], 1
    %12 = vsyncpa %s11, 0
    %13 = vsyncpa [#allocation6], 0
    %s14 = scalar_lea.sflag [#allocation6], 1
    %15 = vsyncpa %s14, 0
    %16 = vsyncpa [#allocation9], 0
    %17 = vsyncpa [#allocation4], 0
    %s18 = scalar_lea.sflag [#allocation4], 1
    %19 = vsyncpa %s18, 0
    loop: start=0, step=1, limit=4
    $region2: #{tpu_custom_call.1} parent=1 // loop_pre_header
      _
    $region3: #{tpu_custom_call.1} parent=1 // loop_header
      %s21 = sphi 0, %s25
      %p22 = scmp.ge.s32.totalorder %s21, 4
      %s28 = sphi 0, %s40
      %s29 = sphi 0, %s36
      %s30 = sphi 0, %s28
      %s31 = sphi 0, %s29
      %s32 = sphi 0, %s30
      %s33 = sphi 0, %s31
      %s45 = sphi 0, %s47
      %s48 = sphi 0, %s45
      %s49 = sphi 0, %s48
      %s65 = sphi 0, %s49
      %s73 = sphi 0, %s75
      %s76 = sphi 0, %s73
      %s77 = sphi 0, %s76
      %s93 = sphi 0, %s77
      %s97 = sphi 0, %s97
      %s99 = sphi 0, %s97
      %s100 = sphi 0, %s99
      %s114 = sphi 0, %s100
      %s118 = sphi 0, %s118
      %s120 = sphi 0, %s118
      %s121 = sphi 0, %s120
      %s135 = sphi 0, %s121
      %s139 = sphi 0, %s139
      %s141 = sphi 0, %s139
      %s142 = sphi 0, %s141
      %s156 = sphi 0, %s142
      %s164 = sphi 0, %s166
      %s167 = sphi 0, %s164
      %s168 = sphi 0, %s167
      %s184 = sphi 0, %s168
    $region4: #{tpu_custom_call.1} parent=1 // loop_header_branch
      %24 = sbr.rel (%p22) target = $region8
    $region5: #{tpu_custom_call.1} parent=1 // loop_body
      %s26 = ssub.s32 %s21, 1
      %s27 = ssub.s32 %s21, 2
      %s34 = sadd.s32 1, %s29
      %p35 = scmp.ge.s32.totalorder %s34, 1
      %s36 = scalar_select %p35, 0, %s34
      %s37 = sadd.s32 1, %s28
      %s38 = scalar_select %p35, %s37, %s28
      %p39 = scmp.ge.s32.totalorder %s38, 2
      %s40 = scalar_select %p39, 0, %s38
      %s41 = ssub.s32 %s28, %s40
      %s42 = ssub.s32 %s29, %s36
      %s43 = sor.u32 %s41, %s42
      %p44 = scmp.eq.s32.totalorder %s43, 0
      %s46 = sadd.s32 %s45, 1
      %s47 = scalar_select %p44, %s45, %s46
      %p50 = pneg %p44
      %p51 = scmp.eq.s32.totalorder %s21, 1
      %p52 = por %p50, %p51
      %p53 = scmp.ne.s32.totalorder %s45, %s48
      %p54 = scmp.eq.s32.totalorder %s21, 0
      %p55 = por %p53, %p54
      %p56 = scmp.ne.s32.totalorder %s45, %s48
      %p57 = scmp.eq.s32.totalorder %s26, 1
      %p58 = por %p56, %p57
      %p59 = scmp.ne.s32.totalorder %s48, %s49
      %p60 = scmp.eq.s32.totalorder %s26, 0
      %p61 = por %p59, %p60
      %p62 = scmp.ne.s32.totalorder %s48, %s49
      %p63 = scmp.eq.s32.totalorder %s27, 1
      %p64 = por %p62, %p63
      %p66 = scmp.ne.s32.totalorder %s49, %s65
      %p67 = scmp.eq.s32.totalorder %s27, 0
      %p68 = por %p66, %p67
      %s69 = ssub.s32 %s28, %s40
      %s70 = ssub.s32 %s29, %s36
      %s71 = sor.u32 %s69, %s70
      %p72 = scmp.eq.s32.totalorder %s71, 0
      %s74 = sadd.s32 %s73, 1
      %s75 = scalar_select %p72, %s73, %s74
      %p78 = pneg %p72
      %p79 = scmp.eq.s32.totalorder %s21, 1
      %p80 = por %p78, %p79
      %p81 = scmp.ne.s32.totalorder %s73, %s76
      %p82 = scmp.eq.s32.totalorder %s21, 0
      %p83 = por %p81, %p82
      %p84 = scmp.ne.s32.totalorder %s73, %s76
      %p85 = scmp.eq.s32.totalorder %s26, 1
      %p86 = por %p84, %p85
      %p87 = scmp.ne.s32.totalorder %s76, %s77
      %p88 = scmp.eq.s32.totalorder %s26, 0
      %p89 = por %p87, %p88
      %p90 = scmp.ne.s32.totalorder %s76, %s77
      %p91 = scmp.eq.s32.totalorder %s27, 1
      %p92 = por %p90, %p91
      %p94 = scmp.ne.s32.totalorder %s77, %s93
      %p95 = scmp.eq.s32.totalorder %s27, 0
      %p96 = por %p94, %p95
      %s98 = sadd.s32 %s97, 1
      %p101 = scmp.eq.s32.totalorder %s21, 1
      %p102 = scmp.ne.s32.totalorder %s97, %s99
      %p103 = scmp.eq.s32.totalorder %s21, 0
      %p104 = por %p102, %p103
      %p105 = scmp.ne.s32.totalorder %s97, %s99
      %p106 = scmp.eq.s32.totalorder %s26, 1
      %p107 = por %p105, %p106
      %p108 = scmp.ne.s32.totalorder %s99, %s100
      %p109 = scmp.eq.s32.totalorder %s26, 0
      %p110 = por %p108, %p109
      %p111 = scmp.ne.s32.totalorder %s99, %s100
      %p112 = scmp.eq.s32.totalorder %s27, 1
      %p113 = por %p111, %p112
      %p115 = scmp.ne.s32.totalorder %s100, %s114
      %p116 = scmp.eq.s32.totalorder %s27, 0
      %p117 = por %p115, %p116
      %s119 = sadd.s32 %s118, 1
      %p122 = scmp.eq.s32.totalorder %s21, 1
      %p123 = scmp.ne.s32.totalorder %s118, %s120
      %p124 = scmp.eq.s32.totalorder %s21, 0
      %p125 = por %p123, %p124
      %p126 = scmp.ne.s32.totalorder %s118, %s120
      %p127 = scmp.eq.s32.totalorder %s26, 1
      %p128 = por %p126, %p127
      %p129 = scmp.ne.s32.totalorder %s120, %s121
      %p130 = scmp.eq.s32.totalorder %s26, 0
      %p131 = por %p129, %p130
      %p132 = scmp.ne.s32.totalorder %s120, %s121
      %p133 = scmp.eq.s32.totalorder %s27, 1
      %p134 = por %p132, %p133
      %p136 = scmp.ne.s32.totalorder %s121, %s135
      %p137 = scmp.eq.s32.totalorder %s27, 0
      %p138 = por %p136, %p137
      %s140 = sadd.s32 %s139, 1
      %p143 = scmp.eq.s32.totalorder %s21, 1
      %p144 = scmp.ne.s32.totalorder %s139, %s141
      %p145 = scmp.eq.s32.totalorder %s21, 0
      %p146 = por %p144, %p145
      %p147 = scmp.ne.s32.totalorder %s139, %s141
      %p148 = scmp.eq.s32.totalorder %s26, 1
      %p149 = por %p147, %p148
      %p150 = scmp.ne.s32.totalorder %s141, %s142
      %p151 = scmp.eq.s32.totalorder %s26, 0
      %p152 = por %p150, %p151
      %p153 = scmp.ne.s32.totalorder %s141, %s142
      %p154 = scmp.eq.s32.totalorder %s27, 1
      %p155 = por %p153, %p154
      %p157 = scmp.ne.s32.totalorder %s142, %s156
      %p158 = scmp.eq.s32.totalorder %s27, 0
      %p159 = por %p157, %p158
      %s160 = ssub.s32 %s28, %s40
      %s161 = ssub.s32 %s29, %s36
      %s162 = sor.u32 %s160, %s161
      %p163 = scmp.eq.s32.totalorder %s162, 0
      %s165 = sadd.s32 %s164, 1
      %s166 = scalar_select %p163, %s164, %s165
      %p169 = pneg %p163
      %p170 = scmp.eq.s32.totalorder %s21, 1
      %p171 = por %p169, %p170
      %p172 = scmp.ne.s32.totalorder %s164, %s167
      %p173 = scmp.eq.s32.totalorder %s21, 0
      %p174 = por %p172, %p173
      %p175 = scmp.ne.s32.totalorder %s164, %s167
      %p176 = scmp.eq.s32.totalorder %s26, 1
      %p177 = por %p175, %p176
      %p178 = scmp.ne.s32.totalorder %s167, %s168
      %p179 = scmp.eq.s32.totalorder %s26, 0
      %p180 = por %p178, %p179
      %p181 = scmp.ne.s32.totalorder %s167, %s168
      %p182 = scmp.eq.s32.totalorder %s27, 1
      %p183 = por %p181, %p182
      %p185 = scmp.ne.s32.totalorder %s168, %s184
      %p186 = scmp.eq.s32.totalorder %s27, 0
      %p187 = por %p185, %p186
      %p188 = scmp.le.s32.totalorder 1, %s21
      %p189 = scmp.lt.s32.totalorder %s21, 3
      %p190 = pnand %p188, %p189
      %p191 = pneg %p190
      // Predicated region
      $region9: #{tpu_custom_call.1} parent=5 // pred_check
        _
      $region10: #{tpu_custom_call.1} parent=5 // pred_check_branch
        %193 = sbr.rel (%p190) target = $region12
      $region11: #{tpu_custom_call.1} parent=5 // pred_region
        %s194 = ssub.s32 %s21, 1
        // Predicated region
        $region13: #{tpu_custom_call.1} parent=11 // pred_check
          %p195 = pneg %p110
        $region14: #{tpu_custom_call.1} parent=11 // pred_check_branch
          %197 = sbr.rel (%p195) target = $region16
        $region15: #{tpu_custom_call.1} parent=11 // pred_region
          %s199 = ssub.s32 64, 64
          %200 = vsyncadd [#allocation6], %s199
          %s202 = sshll.u32 [#allocation7], 4
          %s203 = int_to_ptr.vmem [resolvable:$true] %s202
          %205 = dma.hbm_to_vmem [thread:$0]  %s2, 64, %s203, [#allocation6]
        $region16: #{tpu_custom_call.1} parent=11 // pred_fallthru
          _
        // Predicated region
        $region17: #{tpu_custom_call.1} parent=11 // pred_check
          %p206 = pneg %p131
        $region18: #{tpu_custom_call.1} parent=11 // pred_check_branch
          %208 = sbr.rel (%p206) target = $region20
        $region19: #{tpu_custom_call.1} parent=11 // pred_region
          _
        $region20: #{tpu_custom_call.1} parent=11 // pred_fallthru
          _
        // Predicated region
        $region21: #{tpu_custom_call.1} parent=11 // pred_check
          %p209 = pneg %p152
        $region22: #{tpu_custom_call.1} parent=11 // pred_check_branch
          %211 = sbr.rel (%p209) target = $region24
        $region23: #{tpu_custom_call.1} parent=11 // pred_region
          %s213 = ssub.s32 64, 64
          %214 = vsyncadd [#allocation9], %s213
          %s216 = sshll.u32 [#allocation8], 4
          %s217 = int_to_ptr.vmem [resolvable:$true] %s216
          %219 = dma.hbm_to_vmem [thread:$0]  %s4, 64, %s217, [#allocation9]
        $region24: #{tpu_custom_call.1} parent=11 // pred_fallthru
          _
      $region12: #{tpu_custom_call.1} parent=5 // pred_fallthru
        _
      %p220 = scmp.lt.s32.totalorder %s21, 2
      // Predicated region
      $region25: #{tpu_custom_call.1} parent=5 // pred_check
        %p221 = pneg %p220
      $region26: #{tpu_custom_call.1} parent=5 // pred_check_branch
        %223 = sbr.rel (%p221) target = $region28
      $region27: #{tpu_custom_call.1} parent=5 // pred_region
        // Predicated region
        $region29: #{tpu_custom_call.1} parent=27 // pred_check
          %p224 = pneg %p55
        $region30: #{tpu_custom_call.1} parent=27 // pred_check_branch
          %226 = sbr.rel (%p224) target = $region32
        $region31: #{tpu_custom_call.1} parent=27 // pred_region
          %s227 = sand.u32 %s45, 1
          %s228 = scalar_lea.sflag [#allocation3], %s227
          %s229 = sand.u32 %s45, 1
          %s230 = smul.addr %s229, 16
          %s231 = scalar_lea.vmem [#allocation2], %s230
          %s232 = smul.u32 2, %s29
          %s234 = ssub.s32 256, 256
          %235 = vsyncadd %s228, %s234
          %s236 = smul.addr %s28, 2
          %s237 = sadd.s32 %s232, %s236
          %s238 = smul.addr %s237, 128
          %s239 = scalar_lea.hbm %s0, %s238
          %s241 = sshll.u32 %s231, 4
          %s242 = int_to_ptr.vmem [resolvable:$true] %s241
          %244 = dma.hbm_to_vmem [thread:$0]  %s239, 256, %s242, %s228
        $region32: #{tpu_custom_call.1} parent=27 // pred_fallthru
          _
        // Predicated region
        $region33: #{tpu_custom_call.1} parent=27 // pred_check
          %p245 = pneg %p83
        $region34: #{tpu_custom_call.1} parent=27 // pred_check_branch
          %247 = sbr.rel (%p245) target = $region36
        $region35: #{tpu_custom_call.1} parent=27 // pred_region
          %s248 = sand.u32 %s21, 1
          %s249 = scalar_lea.sflag [#allocation6], %s248
          %s250 = sand.u32 %s73, 1
          %s251 = smul.addr %s250, 16
          %s252 = scalar_lea.vmem [#allocation5], %s251
          %s253 = smul.u32 2, %s29
          %s255 = ssub.s32 256, 256
          %256 = vsyncadd %s249, %s255
          %s257 = smul.addr %s28, 2
          %s258 = sadd.s32 %s253, %s257
          %s259 = smul.addr %s258, 128
          %s260 = scalar_lea.hbm %s1, %s259
          %s262 = sshll.u32 %s252, 4
          %s263 = int_to_ptr.vmem [resolvable:$true] %s262
          %265 = dma.hbm_to_vmem [thread:$0]  %s260, 256, %s263, %s249
        $region36: #{tpu_custom_call.1} parent=27 // pred_fallthru
          _
      $region28: #{tpu_custom_call.1} parent=5 // pred_fallthru
        _
      %p266 = scmp.le.s32.totalorder 1, %s21
      %p267 = scmp.lt.s32.totalorder %s21, 3
      %p268 = pnand %p266, %p267
      %p269 = pneg %p268
      // Predicated region
      $region37: #{tpu_custom_call.1} parent=5 // pred_check
        _
      $region38: #{tpu_custom_call.1} parent=5 // pred_check_branch
        %271 = sbr.rel (%p268) target = $region40
      $region39: #{tpu_custom_call.1} parent=5 // pred_region
        %s272 = ssub.s32 %s21, 1
        %s273 = sand.u32 %s48, 1
        %s274 = scalar_lea.sflag [#allocation3], %s273
        %s275 = sand.u32 %s48, 1
        %s276 = smul.addr %s275, 16
        %s277 = scalar_lea.vmem [#allocation2], %s276
        // Predicated region
        $region41: #{tpu_custom_call.1} parent=39 // pred_check
          %p278 = pneg %p61
        $region42: #{tpu_custom_call.1} parent=39 // pred_check_branch
          %280 = sbr.rel (%p278) target = $region44
        $region43: #{tpu_custom_call.1} parent=39 // pred_region
          %281 = dma.done %s274, 256
        $region44: #{tpu_custom_call.1} parent=39 // pred_fallthru
          _
        %s282 = sand.u32 %s26, 1
        %s283 = scalar_lea.sflag [#allocation6], %s282
        %s284 = sand.u32 %s76, 1
        %s285 = smul.addr %s284, 16
        %s286 = scalar_lea.vmem [#allocation5], %s285
        // Predicated region
        $region45: #{tpu_custom_call.1} parent=39 // pred_check
          %p287 = pneg %p89
        $region46: #{tpu_custom_call.1} parent=39 // pred_check_branch
          %289 = sbr.rel (%p287) target = $region48
        $region47: #{tpu_custom_call.1} parent=39 // pred_region
          %290 = dma.done %s283, 256
        $region48: #{tpu_custom_call.1} parent=39 // pred_fallthru
          _
        // Predicated region
        $region49: #{tpu_custom_call.1} parent=39 // pred_check
          %p291 = pneg %p110
        $region50: #{tpu_custom_call.1} parent=39 // pred_check_branch
          %293 = sbr.rel (%p291) target = $region52
        $region51: #{tpu_custom_call.1} parent=39 // pred_region
          %294 = dma.done [#allocation6], 64
        $region52: #{tpu_custom_call.1} parent=39 // pred_fallthru
          _
        // Predicated region
        $region53: #{tpu_custom_call.1} parent=39 // pred_check
          %p295 = pneg %p152
        $region54: #{tpu_custom_call.1} parent=39 // pred_check_branch
          %297 = sbr.rel (%p295) target = $region56
        $region55: #{tpu_custom_call.1} parent=39 // pred_region
          %298 = dma.done [#allocation9], 64
        $region56: #{tpu_custom_call.1} parent=39 // pred_fallthru
          _
        %s299 = sand.u32 %s48, 1
        %s300 = scalar_lea.sflag [#allocation3], %s299
        %s301 = sand.u32 %s48, 1
        %s302 = smul.addr %s301, 16
        %s303 = scalar_lea.vmem [#allocation2], %s302
        %p304 = pneg %p61
        %p305 = pneg %p58
        %s306 = sand.u32 %s26, 1
        %s307 = scalar_lea.sflag [#allocation6], %s306
        %s308 = sand.u32 %s76, 1
        %s309 = smul.addr %s308, 16
        %s310 = scalar_lea.vmem [#allocation5], %s309
        %p311 = pneg %p89
        %p312 = pneg %p86
        %p313 = pneg %p110
        %p314 = pneg %p107
        %p315 = pneg %p131
        %p316 = pneg %p128
        %p317 = pneg %p152
        %p318 = pneg %p149
        %p319 = pneg %p180
        %p320 = pneg %p177
        %s321 = sand.u32 %s167, 1
        %s322 = scalar_lea.sflag [#allocation4], %s321
        %s323 = sand.u32 %s167, 1
        %s324 = smul.addr %s323, 16
        %s325 = scalar_lea.vmem [#allocation10], %s324
        %s326 = smul.u32 2, %s31
        %s327 = smul.u32 2, %s31
        %s328 = smul.u32 2, %s31
        %v329 = vld [vmem:[%s277] sm:$0xff]
        %v330 = vld [vmem:[%s277 + $0x8] sm:$0xff]
        %v331 = vld [vmem:[%s286] sm:$0xff]
        %v332 = vld [vmem:[%s286 + $0x8] sm:$0xff]
        %v333 = vld [vmem:[#allocation8] sm:$0xf]
        %v334 = vld [vmem:[#allocation8] sm:$0x1]
        %v335 = vld [vmem:[#allocation7] sm:$0xf]
        %v336 = vld [vmem:[%s3] sm:$0xf]
        %vm337 = vcmask 64512
        %v339 = vsel %vm337, %v336, 0
        %341 = vmatprep.subr.mxu0 0.0
        %342 = vmatpush1.msra.mxu0 0.0
        %343 = vmatprep.subr.mxu0 0.0
        %344 = vmatpush1.msra.mxu0 0.0
        %345 = vmatprep.subr.mxu0 0.0
        %346 = vmatpush1.msra.mxu0 0.0
        %347 = vmatprep.subr.mxu0 0.0
        %348 = vmatpush1.msra.mxu0 0.0
        %349 = vmatprep.subr.mxu0 0.0
        %350 = vmatpush1.msra.mxu0 0.0
        %351 = vmatprep.subr.mxu0 0.0
        %352 = vmatpush1.msra.mxu0 0.0
        %353 = vmatprep.subr.mxu0 0.0
        %354 = vmatpush1.msra.mxu0 0.0
        %355 = vmatprep.subr.mxu0 0.0
        %356 = vmatpush1.msra.mxu0 0.0
        %357 = vmatprep.subr.mxu0 0.0
        %358 = vmatpush1.msra.mxu0 0.0
        %359 = vmatprep.subr.mxu0 0.0
        %360 = vmatpush1.msra.mxu0 0.0
        %361 = vmatprep.subr.mxu0 0.0
        %362 = vmatpush1.msra.mxu0 0.0
        %363 = vmatprep.subr.mxu0 0.0
        %364 = vmatpush1.msra.mxu0 0.0
        %365 = vmatprep.subr.mxu0 0.0
        %366 = vmatpush1.msra.mxu0 0.0
        %367 = vmatprep.subr.mxu0 0.0
        %368 = vmatpush1.msra.mxu0 0.0
        %369 = vmatprep.subr.mxu0 0.0
        %370 = vmatpush1.msra.mxu0 0.0
        %371 = vmatprep.subr.mxu0 %v332
        %372 = vmatpush1.msra.mxu0 %v331
        %373 = vmatprep.subr.mxu0 0.0
        %374 = vmatpush2.msra.mxu0 0.0
        %375 = vmatprep.subr.mxu0 0.0
        %376 = vmatpush2.msra.mxu0 0.0
        %377 = vmatprep.subr.mxu0 0.0
        %378 = vmatpush2.msra.mxu0 0.0
        %379 = vmatprep.subr.mxu0 0.0
        %380 = vmatpush2.msra.mxu0 0.0
        %381 = vmatprep.subr.mxu0 0.0
        %382 = vmatpush2.msra.mxu0 0.0
        %383 = vmatprep.subr.mxu0 0.0
        %384 = vmatpush2.msra.mxu0 0.0
        %385 = vmatprep.subr.mxu0 0.0
        %386 = vmatpush2.msra.mxu0 0.0
        %387 = vmatprep.subr.mxu0 0.0
        %388 = vmatpush2.msra.mxu0 0.0
        %389 = vmatprep.subr.mxu0 0.0
        %390 = vmatpush2.msra.mxu0 0.0
        %391 = vmatprep.subr.mxu0 0.0
        %392 = vmatpush2.msra.mxu0 0.0
        %393 = vmatprep.subr.mxu0 0.0
        %394 = vmatpush2.msra.mxu0 0.0
        %395 = vmatprep.subr.mxu0 0.0
        %396 = vmatpush2.msra.mxu0 0.0
        %397 = vmatprep.subr.mxu0 0.0
        %398 = vmatpush2.msra.mxu0 0.0
        %399 = vmatprep.subr.mxu0 0.0
        %400 = vmatpush2.msra.mxu0 0.0
        %401 = vmatprep.subr.mxu0 0.0
        %402 = vmatpush2.msra.mxu0 0.0
        %403 = vmatprep.subr.mxu0 0.0
        %404 = vmatpush2.msra.mxu0 0.0
        %405 = vmatprep.mubr.f32.mxu0 0.0
        %406 = vmatmul.mubr.f32.gmra.mxu0 %v339
        %v407 = vpop.f32.mrf.mxu0
        %v408 = vadd.f32 0.0, %v407
        %v409 = vpop.f32.mrf.mxu0
        %v410 = vadd.f32 0.0, %v409
        %411 = vdwg.mxu0
        %v413 = vsel %vm337, %v335, 0
        %415 = vmatprep.subr.mxu0 0.0
        %416 = vmatpush1.msra.mxu0 0.0
        %417 = vmatprep.subr.mxu0 0.0
        %418 = vmatpush1.msra.mxu0 0.0
        %419 = vmatprep.subr.mxu0 0.0
        %420 = vmatpush1.msra.mxu0 0.0
        %421 = vmatprep.subr.mxu0 0.0
        %422 = vmatpush1.msra.mxu0 0.0
        %423 = vmatprep.subr.mxu0 0.0
        %424 = vmatpush1.msra.mxu0 0.0
        %425 = vmatprep.subr.mxu0 0.0
        %426 = vmatpush1.msra.mxu0 0.0
        %427 = vmatprep.subr.mxu0 0.0
        %428 = vmatpush1.msra.mxu0 0.0
        %429 = vmatprep.subr.mxu0 0.0
        %430 = vmatpush1.msra.mxu0 0.0
        %431 = vmatprep.subr.mxu0 0.0
        %432 = vmatpush1.msra.mxu0 0.0
        %433 = vmatprep.subr.mxu0 0.0
        %434 = vmatpush1.msra.mxu0 0.0
        %435 = vmatprep.subr.mxu0 0.0
        %436 = vmatpush1.msra.mxu0 0.0
        %437 = vmatprep.subr.mxu0 0.0
        %438 = vmatpush1.msra.mxu0 0.0
        %439 = vmatprep.subr.mxu0 0.0
        %440 = vmatpush1.msra.mxu0 0.0
        %441 = vmatprep.subr.mxu0 0.0
        %442 = vmatpush1.msra.mxu0 0.0
        %443 = vmatprep.subr.mxu0 0.0
        %444 = vmatpush1.msra.mxu0 0.0
        %445 = vmatprep.subr.mxu0 %v330
        %446 = vmatpush1.msra.mxu0 %v329
        %447 = vmatprep.subr.mxu0 0.0
        %448 = vmatpush2.msra.mxu0 0.0
        %449 = vmatprep.subr.mxu0 0.0
        %450 = vmatpush2.msra.mxu0 0.0
        %451 = vmatprep.subr.mxu0 0.0
        %452 = vmatpush2.msra.mxu0 0.0
        %453 = vmatprep.subr.mxu0 0.0
        %454 = vmatpush2.msra.mxu0 0.0
        %455 = vmatprep.subr.mxu0 0.0
        %456 = vmatpush2.msra.mxu0 0.0
        %457 = vmatprep.subr.mxu0 0.0
        %458 = vmatpush2.msra.mxu0 0.0
        %459 = vmatprep.subr.mxu0 0.0
        %460 = vmatpush2.msra.mxu0 0.0
        %461 = vmatprep.subr.mxu0 0.0
        %462 = vmatpush2.msra.mxu0 0.0
        %463 = vmatprep.subr.mxu0 0.0
        %464 = vmatpush2.msra.mxu0 0.0
        %465 = vmatprep.subr.mxu0 0.0
        %466 = vmatpush2.msra.mxu0 0.0
        %467 = vmatprep.subr.mxu0 0.0
        %468 = vmatpush2.msra.mxu0 0.0
        %469 = vmatprep.subr.mxu0 0.0
        %470 = vmatpush2.msra.mxu0 0.0
        %471 = vmatprep.subr.mxu0 0.0
        %472 = vmatpush2.msra.mxu0 0.0
        %473 = vmatprep.subr.mxu0 0.0
        %474 = vmatpush2.msra.mxu0 0.0
        %475 = vmatprep.subr.mxu0 0.0
        %476 = vmatpush2.msra.mxu0 0.0
        %477 = vmatprep.subr.mxu0 0.0
        %478 = vmatpush2.msra.mxu0 0.0
        %479 = vmatprep.mubr.f32.mxu0 0.0
        %480 = vmatmul.mubr.f32.gmra.mxu0 %v413
        %v481 = vpop.f32.mrf.mxu0
        %v482 = vadd.f32 %v408, %v481
        %v483 = vpop.f32.mrf.mxu0
        %v484 = vadd.f32 %v410, %v483
        %485 = vdwg.mxu0
        %487 = vset.pattern.permute.xlu0 0
        %488 = vperm.xlu0 %487, %v333
        %v489 = vpop.permute.xlu0 %488
        %v491 = vadd.f32 %v482, %v489
        %v492 = vadd.f32 %v484, %v489
        %v493 = vmax.f32 %v491, 0.0
        %v494 = vmax.f32 %v492, 0.0
        %495 = vset.pattern.permute.xlu0 1
        %496 = vperm.xlu0 %495, %v333
        %v497 = vpop.permute.xlu0 %496
        %v499 = vmul.f32 %v493, %v497
        %v500 = vmul.f32 %v494, %v497
        %vm501 = vcmask 1043456
        %v502 = vsel %vm501, %v499, 0.0
        %v503 = vrot.slane %v502, 4
        %v504 = vadd.f32 %v502, %v503
        %v505 = vrot.slane %v504, 2
        %v506 = vadd.f32 %v504, %v505
        %v507 = vrot.slane %v506, 1
        %v508 = vadd.f32 %v506, %v507
        %v509 = vsel %vm501, %v500, 0.0
        %v510 = vrot.slane %v509, 4
        %v511 = vadd.f32 %v509, %v510
        %v512 = vrot.slane %v511, 2
        %v513 = vadd.f32 %v511, %v512
        %v514 = vrot.slane %v513, 1
        %v515 = vadd.f32 %v513, %v514
        %517 = vset.pattern.permute.xlu0 2
        %518 = vperm.xlu0 %517, %v334
        %v519 = vpop.permute.xlu0 %518
        %v521 = vadd.f32 %v508, %v519
        %v522 = vadd.f32 %v515, %v519
        %v523 = vxor.u32 %v521, 2147483648
        %v524 = vxor.u32 %v522, 2147483648
        %v525 = vmul.f32 %v523, 1.442695
        %v526 = vpow.pop %v525
        %v527 = vmul.f32 %v524, 1.442695
        %v528 = vpow.pop %v527
        %v529 = vadd.f32 %v526, 1.0
        %v530 = vadd.f32 %v528, 1.0
        %v531 = vrcp.pop %v529
        %v532 = vmul.f32 1.0, %v531
        %v533 = vrcp.pop %v530
        %v534 = vmul.f32 1.0, %v533
        %v535 = vlaneseq
        %v536 = vshrl.u32 %v535, 7
        %v537 = vsub.s32 0, %v536
        %v538 = vrot.slane %v532, %v537
        %v539 = vlaneseq
        %v540 = vshrl.u32 %v539, 7
        %v541 = vsub.s32 0, %v540
        %v542 = vrot.slane %v534, %v541
        %v543 = vmul.f32 %v331, %v538
        %v544 = vmul.f32 %v332, %v542
        %545 = vst [vmem:[%s325] sm:$0xff] %v543
        %546 = vst [vmem:[%s325 + $0x8] sm:$0xff] %v544
        %s547 = sand.u32 %s167, 1
        %s548 = scalar_lea.sflag [#allocation4], %s547
        %s549 = sand.u32 %s167, 1
        %s550 = smul.addr %s549, 16
        %s551 = scalar_lea.vmem [#allocation10], %s550
        // Predicated region
        $region57: #{tpu_custom_call.1} parent=39 // pred_check
          %p552 = pneg %p177
        $region58: #{tpu_custom_call.1} parent=39 // pred_check_branch
          %554 = sbr.rel (%p552) target = $region60
        $region59: #{tpu_custom_call.1} parent=39 // pred_region
          %s555 = smul.u32 2, %s31
          %s557 = ssub.s32 256, 256
          %558 = vsyncadd %s548, %s557
          %s559 = smul.addr %s30, 2
          %s560 = sadd.s32 %s555, %s559
          %s561 = smul.addr %s560, 128
          %s562 = scalar_lea.hbm %s5, %s561
          %s564 = sshll.u32 %s551, 4
          %s565 = int_to_ptr.vmem [resolvable:$true] %s564
          %567 = dma.vmem_to_hbm [thread:$0]  %s565, 256, %s562, %s548
        $region60: #{tpu_custom_call.1} parent=39 // pred_fallthru
          _
      $region40: #{tpu_custom_call.1} parent=5 // pred_fallthru
        _
      %p568 = scmp.le.s32.totalorder 2, %s21
      // Predicated region
      $region61: #{tpu_custom_call.1} parent=5 // pred_check
        %p569 = pneg %p568
      $region62: #{tpu_custom_call.1} parent=5 // pred_check_branch
        %571 = sbr.rel (%p569) target = $region64
      $region63: #{tpu_custom_call.1} parent=5 // pred_region
        %s572 = ssub.s32 %s21, 2
        // Predicated region
        $region65: #{tpu_custom_call.1} parent=63 // pred_check
          %p573 = pneg %p183
        $region66: #{tpu_custom_call.1} parent=63 // pred_check_branch
          %575 = sbr.rel (%p573) target = $region68
        $region67: #{tpu_custom_call.1} parent=63 // pred_region
          %s576 = sand.u32 %s168, 1
          %s577 = scalar_lea.sflag [#allocation4], %s576
          %s578 = sand.u32 %s168, 1
          %s579 = smul.addr %s578, 16
          %s580 = scalar_lea.vmem [#allocation10], %s579
          %581 = dma.done %s577, 256
        $region68: #{tpu_custom_call.1} parent=63 // pred_fallthru
          _
      $region64: #{tpu_custom_call.1} parent=5 // pred_fallthru
        _
    $region6: #{tpu_custom_call.1} parent=1 // loop_footer
      %s25 = sadd.s32 1, %s21
    $region7: #{tpu_custom_call.1} parent=1 // loop_footer_branch
      %20 = sbr.rel target = $region3
    $region8: #{tpu_custom_call.1} parent=1 // loop_exit
      _
    %582 = vsyncpa [#allocation3], 1
    %s583 = scalar_lea.sflag [#allocation3], 1
    %584 = vsyncpa %s583, 1
    %585 = vsyncpa [#allocation6], 1
    %s586 = scalar_lea.sflag [#allocation6], 1
    %587 = vsyncpa %s586, 1
    %588 = vsyncpa [#allocation9], 1
    %589 = vsyncpa [#allocation4], 1
    %s590 = scalar_lea.sflag [#allocation4], 1
    %591 = vsyncpa %s590, 1

</llo_original>
